<compile_context>
chip_gen: v7x
topology: tpu7x:2x2x1
jax: 0.10.0
libtpu: 0.0.40
codegen_flags: <defaults>
</compile_context>

<pallas_src>
import functools

import jax
import jax.numpy as jnp
from jax.experimental import pallas as pl
from jax.experimental.pallas import tpu as pltpu


def _round_up(n: int, m: int) -> int:
    return ((n + m - 1) // m) * m


def _default_compute_dtype():
    """bf16 compute on generations with bf16 VALU/EUP (v6e, v7x); f32 otherwise."""
    try:
        kind = jax.devices()[0].device_kind.lower()
    except Exception:
        return jnp.float32
    if ("v6" in kind) or ("v7" in kind):
        return jnp.bfloat16
    return jnp.float32


def mlp_kernel(p1_ref, w2_ref, x_ref, o_ref):
    # p1_ref: (H, 4) f32, VMEM-resident across the whole grid.
    #   col 0,1 : W1 (PyTorch layout (H, 2));  col 2 : b1;  col 3 rows 0..2 : b2
    # w2_ref : (8, H) compute-dtype, rows 0..2 = W2 (PyTorch (3, H)), rest zero.
    # x_ref  : (NCPT, 2, CH) compute-dtype  -- batch on the lane axis, chunked.
    # o_ref  : (NCPT, 3, CH) float32
    cdt = w2_ref.dtype

    # Hoist tiny loop-invariant parameter loads above the chunk loop
    # (JAX does not CSE broadcast_in_dim).
    w10 = p1_ref[:, 0:1].astype(cdt)          # (H, 1)
    w11 = p1_ref[:, 1:2].astype(cdt)          # (H, 1)
    b1 = p1_ref[:, 2:3].astype(cdt)           # (H, 1)
    b2 = p1_ref[0:3, 3:4]                     # (3, 1) f32
    w2 = w2_ref[...]                          # (8, H)

    nchunks = x_ref.shape[0]

    def body(c, carry):
        x_c = x_ref[c]                        # (2, CH)
        x0 = x_c[0:1, :]                      # (1, CH)
        x1 = x_c[1:2, :]                      # (1, CH)
        # Layer 1: K=2 is far too small for the MXU -> two broadcast FMAs on the
        # VPU plus tanh on the EUP; h stays in vregs (H x CH).
        h = jnp.tanh(w10 * x0 + w11 * x1 + b1)                      # (H, CH) cdt
        # Layer 2 on the otherwise-idle MXU: (8, H) @ (H, CH), f32 accumulation.
        o8 = jnp.dot(w2, h, preferred_element_type=jnp.float32)     # (8, CH) f32
        o3 = o8[0:3, :] + b2                                        # (3, CH) f32
        o_ref[c] = jax.nn.sigmoid(o3).astype(o_ref.dtype)
        return carry

    unroll = 2 if (nchunks % 2 == 0) else 1
    jax.lax.fori_loop(0, nchunks, body, 0, unroll=unroll)


@functools.partial(jax.jit, static_argnames=("block_batch", "chunk", "compute_dtype"))
def _network_forward_impl(x, w1, b1, w2, b2, *, block_batch, chunk, compute_dtype):
    B = x.shape[0]
    H = w1.shape[0]
    assert x.shape[1] == 2 and w1.shape == (H, 2)
    assert b1.shape == (H,) and w2.shape == (3, H) and b2.shape == (3,)
    assert H >= 3          # b2 is packed into the first 3 rows of params column 3
    assert chunk % 128 == 0

    f32 = jnp.float32
    cdt = compute_dtype

    # Packed layer-1 params (+ b2), f32, VMEM-resident (constant index_map).
    b2_col = jnp.zeros((H,), f32).at[:3].set(b2.astype(f32))
    p1 = jnp.stack([w1[:, 0], w1[:, 1], b1, b2_col], axis=1).astype(f32)   # (H, 4)
    # W2 padded to 8 sublanes (MXU M-dim), in the compute dtype.
    w2p = jnp.zeros((8, H), cdt).at[:3, :].set(w2.astype(cdt))             # (8, H)

    # Batch on the lane axis, chunked: x3[n, k, c] = x[n*chunk + c, k].
    tb = _round_up(min(block_batch, _round_up(B, chunk)), chunk)
    b_pad = _round_up(B, tb)
    nc_total = b_pad // chunk
    ncpt = tb // chunk

    xp = jnp.zeros((b_pad, 2), f32).at[:B, :].set(x.astype(f32))
    # TODO(synk): fold this input transpose pass (and the output one below) into
    # the producer/consumer or an in-kernel stride-2 lane de-interleave to save
    # the two extra wrapper-side HBM passes at very large B.
    x3 = xp.reshape(nc_total, chunk, 2).transpose(0, 2, 1).astype(cdt)     # (NC, 2, CH)

    o3 = pl.pallas_call(
        mlp_kernel,
        out_shape=jax.ShapeDtypeStruct((nc_total, 3, chunk), f32),
        grid_spec=pltpu.PrefetchScalarGridSpec(
            num_scalar_prefetch=0,
            grid=(nc_total // ncpt,),
            in_specs=[
                pl.BlockSpec((H, 4), lambda i: (0, 0)),              # params: resident
                pl.BlockSpec((8, H), lambda i: (0, 0)),              # W2 pad: resident
                pl.BlockSpec((ncpt, 2, chunk), lambda i: (i, 0, 0)),  # x tile
            ],
            out_specs=pl.BlockSpec((ncpt, 3, chunk), lambda i: (i, 0, 0)),
        ),
        compiler_params=pltpu.CompilerParams(
            # Independent batch tiles: lets v7x shard tiles across both TensorCores.
            dimension_semantics=("parallel",),
        ),
    )(p1, w2p, x3)

    # Layout plumbing back to the PyTorch (B, 3) convention.
    return o3.transpose(0, 2, 1).reshape(b_pad, 3)[:B, :]


def network_forward(x, w1, b1, w2, b2, *, block_batch=32768, chunk=512,
                    compute_dtype=None):
    """Pallas equivalent of Network.forward.

    x : (B, 2) float32
    w1: (H, 2)  -- nn.Linear(2, H).weight
    b1: (H,)    -- nn.Linear(2, H).bias
    w2: (3, H)  -- nn.Linear(H, 3).weight
    b2: (3,)    -- nn.Linear(H, 3).bias
    returns (B, 3) float32
    """
    if compute_dtype is None:
        compute_dtype = _default_compute_dtype()
    return _network_forward_impl(x, w1, b1, w2, b2, block_batch=block_batch,
                                 chunk=chunk, compute_dtype=compute_dtype)


def init_params(key, hidden_size):
    # nn.Linear default init: U(-1/sqrt(fan_in), 1/sqrt(fan_in)), PyTorch layout.
    k1, k2, k3, k4 = jax.random.split(key, 4)
    bound1 = 1.0 / jnp.sqrt(2.0)
    bound2 = 1.0 / jnp.sqrt(float(hidden_size))
    w1 = jax.random.uniform(k1, (hidden_size, 2), jnp.float32, -bound1, bound1)
    b1 = jax.random.uniform(k2, (hidden_size,), jnp.float32, -bound1, bound1)
    w2 = jax.random.uniform(k3, (3, hidden_size), jnp.float32, -bound2, bound2)
    b2 = jax.random.uniform(k4, (3,), jnp.float32, -bound2, bound2)
    return w1, b1, w2, b2


if __name__ == "__main__":
    key = jax.random.PRNGKey(0)
    k_x, k_p, k_x2 = jax.random.split(key, 3)

    B, H = 8, 32
    x = jax.random.normal(k_x, (B, 2), jnp.float32)
    w1, b1, w2, b2 = init_params(k_p, H)

    cdt = _default_compute_dtype()
    tol = 2e-5 if cdt == jnp.float32 else 3e-2   # bf16 compute on v6e/v7x

    out = jax.block_until_ready(network_forward(x, w1, b1, w2, b2))
    ref = jax.nn.sigmoid(jnp.tanh(x @ w1.T + b1) @ w2.T + b2)
    assert out.shape == (B, 3)
    assert jnp.allclose(out, ref, atol=tol, rtol=tol)

    # Multi-tile + multi-chunk + ragged-tail path:
    # B2=3000, block_batch=2048 -> 2 parallel grid steps, 4 in-kernel chunks each.
    B2 = 3000
    x2 = jax.random.normal(k_x2, (B2, 2), jnp.float32)
    out2 = jax.block_until_ready(
        network_forward(x2, w1, b1, w2, b2, block_batch=2048)
    )
    ref2 = jax.nn.sigmoid(jnp.tanh(x2 @ w1.T + b1) @ w2.T + b2)
    assert out2.shape == (B2, 3)
    assert jnp.allclose(out2, ref2, atol=tol, rtol=tol)

    print("KERNEL_OK")
</pallas_src>

<mosaic_0001>
module attributes {stable_mosaic.version = 11 : i64} {
  func.func @mlp_kernel(%arg0: i32, %arg1: memref<32x4xf32, #tpu.memory_space<vmem>>, %arg2: memref<8x32xf32, #tpu.memory_space<vmem>>, %arg3: memref<1x2x512xf32, #tpu.memory_space<vmem>>, %arg4: memref<1x3x512xf32, #tpu.memory_space<vmem>>) attributes {dimension_semantics = [#tpu.dimension_semantics<parallel>], iteration_bounds = array<i64: 1>, scalar_prefetch = 0 : i64, scratch_operands = 0 : i64, tpu.core_type = #tpu.core_type<tc>, window_params = [{pipeline_mode = #tpu.pipeline_mode<synchronous>, transform_indices = @transform_0, window_bounds = array<i64: 32, 4>}, {pipeline_mode = #tpu.pipeline_mode<synchronous>, transform_indices = @transform_1, window_bounds = array<i64: 8, 32>}, {transform_indices = @transform_2, window_bounds = array<i64: 1, 2, 512>}, {transform_indices = @transform_3, window_bounds = array<i64: 1, 3, 512>}]} {
    %c0 = arith.constant 0 : index
    %c0_0 = arith.constant 0 : index
    %0 = vector.load %arg1[%c0, %c0_0] : memref<32x4xf32, #tpu.memory_space<vmem>>, vector<32x1xf32>
    %c0_1 = arith.constant 0 : index
    %c1 = arith.constant 1 : index
    %1 = vector.load %arg1[%c0_1, %c1] : memref<32x4xf32, #tpu.memory_space<vmem>>, vector<32x1xf32>
    %c0_2 = arith.constant 0 : index
    %c2 = arith.constant 2 : index
    %2 = vector.load %arg1[%c0_2, %c2] : memref<32x4xf32, #tpu.memory_space<vmem>>, vector<32x1xf32>
    %c0_3 = arith.constant 0 : index
    %c3 = arith.constant 3 : index
    %3 = vector.load %arg1[%c0_3, %c3] : memref<32x4xf32, #tpu.memory_space<vmem>>, vector<3x1xf32>
    %c0_4 = arith.constant 0 : index
    %c0_5 = arith.constant 0 : index
    %4 = vector.load %arg2[%c0_4, %c0_5] : memref<8x32xf32, #tpu.memory_space<vmem>>, vector<8x32xf32>
    %c0_i32 = arith.constant 0 : i32
    %5 = arith.index_cast %c0_i32 : i32 to index
    %c0_6 = arith.constant 0 : index
    %c0_7 = arith.constant 0 : index
    %6 = vector.load %arg3[%5, %c0_6, %c0_7] : memref<1x2x512xf32, #tpu.memory_space<vmem>>, vector<1x2x512xf32>
    %7 = vector.shape_cast %6 : vector<1x2x512xf32> to vector<2x512xf32>
    %8 = vector.extract_strided_slice %7 {offsets = [0, 0], sizes = [1, 512], strides = [1, 1]} : vector<2x512xf32> to vector<1x512xf32>
    %9 = vector.extract_strided_slice %7 {offsets = [1, 0], sizes = [1, 512], strides = [1, 1]} : vector<2x512xf32> to vector<1x512xf32>
    %10 = vector.broadcast %0 : vector<32x1xf32> to vector<32x512xf32>
    %11 = vector.broadcast %8 : vector<1x512xf32> to vector<32x512xf32>
    %12 = arith.mulf %10, %11 : vector<32x512xf32>
    %13 = vector.broadcast %1 : vector<32x1xf32> to vector<32x512xf32>
    %14 = vector.broadcast %9 : vector<1x512xf32> to vector<32x512xf32>
    %15 = arith.mulf %13, %14 : vector<32x512xf32>
    %16 = arith.addf %12, %15 : vector<32x512xf32>
    %17 = vector.broadcast %2 : vector<32x1xf32> to vector<32x512xf32>
    %18 = arith.addf %16, %17 : vector<32x512xf32>
    %19 = math.tanh %18 : vector<32x512xf32>
    %cst = arith.constant dense<0.000000e+00> : vector<8x512xf32>
    %20 = tpu.matmul %4, %19, %cst {dimension_numbers = #tpu.dot_dimension_numbers<[1], [0], [0], [1], [0, 0, 1, 1], [], []>} : vector<8x32xf32>, vector<32x512xf32>, vector<8x512xf32> -> vector<8x512xf32>
    %21 = vector.extract_strided_slice %20 {offsets = [0, 0], sizes = [3, 512], strides = [1, 1]} : vector<8x512xf32> to vector<3x512xf32>
    %22 = vector.broadcast %3 : vector<3x1xf32> to vector<3x512xf32>
    %23 = arith.addf %21, %22 : vector<3x512xf32>
    %24 = arith.negf %23 : vector<3x512xf32>
    %25 = math.exp %24 : vector<3x512xf32>
    %cst_8 = arith.constant 1.000000e+00 : f32
    %26 = vector.broadcast %cst_8 : f32 to vector<3x512xf32>
    %27 = arith.addf %26, %25 : vector<3x512xf32>
    %28 = arith.divf %26, %27 : vector<3x512xf32>
    %29 = arith.index_cast %c0_i32 : i32 to index
    %c0_9 = arith.constant 0 : index
    %c0_10 = arith.constant 0 : index
    %30 = vector.load %arg4[%29, %c0_9, %c0_10] : memref<1x3x512xf32, #tpu.memory_space<vmem>>, vector<1x3x512xf32>
    %31 = vector.shape_cast %30 : vector<1x3x512xf32> to vector<3x512xf32>
    %32 = vector.shape_cast %28 : vector<3x512xf32> to vector<1x3x512xf32>
    tpu.vector_store %arg4[%29, %c0_9, %c0_10], %32 {strides = array<i32>} : memref<1x3x512xf32, #tpu.memory_space<vmem>>, vector<1x3x512xf32>,
    %c1_i32 = arith.constant 1 : i32
    return
  }
  func.func @transform_0(%arg0: i32) -> (i32, i32) {
    %c0_i32 = arith.constant 0 : i32
    %c0_i32_0 = arith.constant 0 : i32
    %c0_i32_1 = arith.constant 0 : i32
    return %c0_i32, %c0_i32_0 : i32, i32
  }
  func.func @transform_1(%arg0: i32) -> (i32, i32) {
    %c0_i32 = arith.constant 0 : i32
    %c0_i32_0 = arith.constant 0 : i32
    %c0_i32_1 = arith.constant 0 : i32
    return %c0_i32, %c0_i32_0 : i32, i32
  }
  func.func @transform_2(%arg0: i32) -> (i32, i32, i32) {
    %c0_i32 = arith.constant 0 : i32
    %c0_i32_0 = arith.constant 0 : i32
    %c0_i32_1 = arith.constant 0 : i32
    return %arg0, %c0_i32, %c0_i32_0 : i32, i32, i32
  }
  func.func @transform_3(%arg0: i32) -> (i32, i32, i32) {
    %c0_i32 = arith.constant 0 : i32
    %c0_i32_0 = arith.constant 0 : i32
    %c0_i32_1 = arith.constant 0 : i32
    return %arg0, %c0_i32, %c0_i32_0 : i32, i32, i32
  }
}

</mosaic_0001>

<llo_original>
// kernel: _network_forward_impl.1
$region0: #{_network_forward_impl.1}
  #allocation0 [shape = 'u32[]', space=smem, size = 0x4, offset = 0x4, fixed_abs, tag = 'smem constant byte address 0x4 - core index']
  #allocation1 [shape = 'u32[144,128]{1,0:T(1,128)}', space=vmem, size = 0x12000, scoped, tag = 'internal scratch']
  %s0 = inlined_call_operand.vmem [shape: f32[32,4], index: 0, kind: input, shape index: {}]
  %s1 = inlined_call_operand.vmem [shape: f32[8,32], index: 1, kind: input, shape index: {}]
  %s2 = inlined_call_operand.vmem [shape: f32[1,2,512], index: 2, kind: input, shape index: {}]
  %s3 = inlined_call_operand.vmem [shape: f32[1,3,512], index: 3, kind: output, shape index: {}]
  %s4 = sld [smem:[#allocation0]]
  $region22: #{_network_forward_impl.1} parent=0
    _
  %s6 = ssub.s32 1, %s4
  %s7 = scalar_select 0, %s6, %s4
  // Predicated region
  $region2: #{_network_forward_impl.1} parent=0 // pred_check
    _
  $region3: #{_network_forward_impl.1} parent=0 // pred_check_branch
    %9 = sbr.rel (0) target = $region5
  $region4: #{_network_forward_impl.1} parent=0 // pred_region
    _
  $region5: #{_network_forward_impl.1} parent=0 // pred_fallthru
    _
  // Predicated region
  $region6: #{_network_forward_impl.1} parent=0 // pred_check
    _
  $region7: #{_network_forward_impl.1} parent=0 // pred_check_branch
    %11 = sbr.rel (0) target = $region9
  $region8: #{_network_forward_impl.1} parent=0 // pred_region
    _
  $region9: #{_network_forward_impl.1} parent=0 // pred_fallthru
    _
  // Predicated region
  $region10: #{_network_forward_impl.1} parent=0 // pred_check
    _
  $region11: #{_network_forward_impl.1} parent=0 // pred_check_branch
    %13 = sbr.rel (0) target = $region13
  $region12: #{_network_forward_impl.1} parent=0 // pred_region
    _
  $region13: #{_network_forward_impl.1} parent=0 // pred_fallthru
    _
  %v14 = vld [vmem:[%s0] sm:$0xff]
  %v15 = vld [vmem:[%s0 + $0x8] sm:$0xff]
  %v16 = vld [vmem:[%s0 + $0x10] sm:$0xff]
  %v17 = vld [vmem:[%s0 + $0x18] sm:$0xff]
  %v18 = vld [vmem:[%s0] sm:$0x7]
  %v19 = vld [vmem:[%s1] sm:$0xff]
  %v20 = vld [vmem:[%s2] sm:$0xff]
  %22 = vset.pattern.permute.xlu0 0
  %23 = vperm.xlu0 %22, %v14
  %v24 = vpop.permute.xlu0 %23
  %27 = vset.pattern.permute.xlu0 0
  %28 = vperm.xlu0 %27, %v15
  %v29 = vpop.permute.xlu0 %28
  %32 = vset.pattern.permute.xlu0 0
  %33 = vperm.xlu0 %32, %v16
  %v34 = vpop.permute.xlu0 %33
  %37 = vset.pattern.permute.xlu0 0
  %38 = vperm.xlu0 %37, %v17
  %v39 = vpop.permute.xlu0 %38
  %v42 = vlaneseq
  %v43 = vshrl.u32 %v42, 7
  %v44 = vsub.s32 0, %v43
  %v45 = vrot.slane %v20, %v44
  %v46 = vlaneseq
  %v47 = vshrl.u32 %v46, 7
  %v48 = vsub.s32 2, %v47
  %v49 = vrot.slane %v20, %v48
  %v50 = vlaneseq
  %v51 = vshrl.u32 %v50, 7
  %v52 = vsub.s32 4, %v51
  %v53 = vrot.slane %v20, %v52
  %v54 = vlaneseq
  %v55 = vshrl.u32 %v54, 7
  %v56 = vsub.s32 6, %v55
  %v57 = vrot.slane %v20, %v56
  %v62 = vlaneseq
  %v63 = vshrl.u32 %v62, 7
  %v64 = vsub.s32 0, %v63
  %v65 = vrot.slane %v45, %v64
  %v66 = vlaneseq
  %v67 = vshrl.u32 %v66, 7
  %v68 = vsub.s32 0, %v67
  %v69 = vrot.slane %v49, %v68
  %v70 = vlaneseq
  %v71 = vshrl.u32 %v70, 7
  %v72 = vsub.s32 0, %v71
  %v73 = vrot.slane %v53, %v72
  %v74 = vlaneseq
  %v75 = vshrl.u32 %v74, 7
  %v76 = vsub.s32 0, %v75
  %v77 = vrot.slane %v57, %v76
  %v78 = vmul.f32 %v24, %v65
  %v79 = vmul.f32 %v24, %v69
  %v80 = vmul.f32 %v24, %v73
  %v81 = vmul.f32 %v24, %v77
  %v82 = vmul.f32 %v29, %v65
  %v83 = vmul.f32 %v29, %v69
  %v84 = vmul.f32 %v29, %v73
  %v85 = vmul.f32 %v29, %v77
  %v86 = vmul.f32 %v34, %v65
  %v87 = vmul.f32 %v34, %v69
  %v88 = vmul.f32 %v34, %v73
  %v89 = vmul.f32 %v34, %v77
  %v90 = vmul.f32 %v39, %v65
  %v91 = vmul.f32 %v39, %v69
  %v92 = vmul.f32 %v39, %v73
  %v93 = vmul.f32 %v39, %v77
  %94 = vset.pattern.permute.xlu0 1
  %95 = vperm.xlu0 %94, %v14
  %v96 = vpop.permute.xlu0 %95
  %98 = vset.pattern.permute.xlu0 1
  %99 = vperm.xlu0 %98, %v15
  %v100 = vpop.permute.xlu0 %99
  %102 = vset.pattern.permute.xlu0 1
  %103 = vperm.xlu0 %102, %v16
  %v104 = vpop.permute.xlu0 %103
  %106 = vset.pattern.permute.xlu0 1
  %107 = vperm.xlu0 %106, %v17
  %v108 = vpop.permute.xlu0 %107
  %v110 = vlaneseq
  %v111 = vshrl.u32 %v110, 7
  %v112 = vsub.s32 1, %v111
  %v113 = vrot.slane %v20, %v112
  %v114 = vlaneseq
  %v115 = vshrl.u32 %v114, 7
  %v116 = vsub.s32 3, %v115
  %v117 = vrot.slane %v20, %v116
  %v118 = vlaneseq
  %v119 = vshrl.u32 %v118, 7
  %v120 = vsub.s32 5, %v119
  %v121 = vrot.slane %v20, %v120
  %v122 = vlaneseq
  %v123 = vshrl.u32 %v122, 7
  %v124 = vsub.s32 7, %v123
  %v125 = vrot.slane %v20, %v124
  %v130 = vlaneseq
  %v131 = vshrl.u32 %v130, 7
  %v132 = vsub.s32 1, %v131
  %v133 = vrot.slane %v113, %v132
  %v134 = vlaneseq
  %v135 = vshrl.u32 %v134, 7
  %v136 = vsub.s32 1, %v135
  %v137 = vrot.slane %v117, %v136
  %v138 = vlaneseq
  %v139 = vshrl.u32 %v138, 7
  %v140 = vsub.s32 1, %v139
  %v141 = vrot.slane %v121, %v140
  %v142 = vlaneseq
  %v143 = vshrl.u32 %v142, 7
  %v144 = vsub.s32 1, %v143
  %v145 = vrot.slane %v125, %v144
  %v146 = vmul.f32 %v96, %v133
  %v147 = vmul.f32 %v96, %v137
  %v148 = vmul.f32 %v96, %v141
  %v149 = vmul.f32 %v96, %v145
  %v150 = vmul.f32 %v100, %v133
  %v151 = vmul.f32 %v100, %v137
  %v152 = vmul.f32 %v100, %v141
  %v153 = vmul.f32 %v100, %v145
  %v154 = vmul.f32 %v104, %v133
  %v155 = vmul.f32 %v104, %v137
  %v156 = vmul.f32 %v104, %v141
  %v157 = vmul.f32 %v104, %v145
  %v158 = vmul.f32 %v108, %v133
  %v159 = vmul.f32 %v108, %v137
  %v160 = vmul.f32 %v108, %v141
  %v161 = vmul.f32 %v108, %v145
  %v162 = vadd.f32 %v78, %v146
  %v163 = vadd.f32 %v79, %v147
  %v164 = vadd.f32 %v80, %v148
  %v165 = vadd.f32 %v81, %v149
  %v166 = vadd.f32 %v82, %v150
  %v167 = vadd.f32 %v83, %v151
  %v168 = vadd.f32 %v84, %v152
  %v169 = vadd.f32 %v85, %v153
  %v170 = vadd.f32 %v86, %v154
  %v171 = vadd.f32 %v87, %v155
  %v172 = vadd.f32 %v88, %v156
  %v173 = vadd.f32 %v89, %v157
  %v174 = vadd.f32 %v90, %v158
  %v175 = vadd.f32 %v91, %v159
  %v176 = vadd.f32 %v92, %v160
  %v177 = vadd.f32 %v93, %v161
  %178 = vset.pattern.permute.xlu0 2
  %179 = vperm.xlu0 %178, %v14
  %v180 = vpop.permute.xlu0 %179
  %182 = vset.pattern.permute.xlu0 2
  %183 = vperm.xlu0 %182, %v15
  %v184 = vpop.permute.xlu0 %183
  %186 = vset.pattern.permute.xlu0 2
  %187 = vperm.xlu0 %186, %v16
  %v188 = vpop.permute.xlu0 %187
  %190 = vset.pattern.permute.xlu0 2
  %191 = vperm.xlu0 %190, %v17
  %v192 = vpop.permute.xlu0 %191
  %v194 = vadd.f32 %v162, %v180
  %v195 = vadd.f32 %v163, %v180
  %v196 = vadd.f32 %v164, %v180
  %v197 = vadd.f32 %v165, %v180
  %v198 = vadd.f32 %v166, %v184
  %v199 = vadd.f32 %v167, %v184
  %v200 = vadd.f32 %v168, %v184
  %v201 = vadd.f32 %v169, %v184
  %v202 = vadd.f32 %v170, %v188
  %v203 = vadd.f32 %v171, %v188
  %v204 = vadd.f32 %v172, %v188
  %v205 = vadd.f32 %v173, %v188
  %v206 = vadd.f32 %v174, %v192
  %v207 = vadd.f32 %v175, %v192
  %v208 = vadd.f32 %v176, %v192
  %v209 = vadd.f32 %v177, %v192
  %v210 = vtanh.pop %v194
  %v211 = vtanh.pop %v195
  %v212 = vtanh.pop %v196
  %v213 = vtanh.pop %v197
  %v214 = vtanh.pop %v198
  %v215 = vtanh.pop %v199
  %v216 = vtanh.pop %v200
  %v217 = vtanh.pop %v201
  %v218 = vtanh.pop %v202
  %v219 = vtanh.pop %v203
  %v220 = vtanh.pop %v204
  %v221 = vtanh.pop %v205
  %v222 = vtanh.pop %v206
  %v223 = vtanh.pop %v207
  %v224 = vtanh.pop %v208
  %v225 = vtanh.pop %v209
  %vm226 = vcmask 261120
  %v228 = vsel %vm226, %v19, 0
  %230 = vmatprep.subr.mxu0 %v211
  %231 = vmatpush1.msra.mxu0 %v210
  %232 = vmatprep.subr.mxu0 %v215
  %233 = vmatpush1.msra.mxu0 %v214
  %234 = vmatprep.subr.mxu0 %v219
  %235 = vmatpush1.msra.mxu0 %v218
  %236 = vmatprep.subr.mxu0 %v223
  %237 = vmatpush1.msra.mxu0 %v222
  %238 = vmatprep.subr.mxu0 0.0
  %239 = vmatpush1.msra.mxu0 0.0
  %240 = vmatprep.subr.mxu0 0.0
  %241 = vmatpush1.msra.mxu0 0.0
  %242 = vmatprep.subr.mxu0 0.0
  %243 = vmatpush1.msra.mxu0 0.0
  %244 = vmatprep.subr.mxu0 0.0
  %245 = vmatpush1.msra.mxu0 0.0
  %246 = vmatprep.subr.mxu0 0.0
  %247 = vmatpush1.msra.mxu0 0.0
  %248 = vmatprep.subr.mxu0 0.0
  %249 = vmatpush1.msra.mxu0 0.0
  %250 = vmatprep.subr.mxu0 0.0
  %251 = vmatpush1.msra.mxu0 0.0
  %252 = vmatprep.subr.mxu0 0.0
  %253 = vmatpush1.msra.mxu0 0.0
  %254 = vmatprep.subr.mxu0 0.0
  %255 = vmatpush1.msra.mxu0 0.0
  %256 = vmatprep.subr.mxu0 0.0
  %257 = vmatpush1.msra.mxu0 0.0
  %258 = vmatprep.subr.mxu0 0.0
  %259 = vmatpush1.msra.mxu0 0.0
  %260 = vmatprep.subr.mxu0 0.0
  %261 = vmatpush1.msra.mxu0 0.0
  %262 = vmatprep.subr.mxu0 0.0
  %263 = vmatpush1.msra.mxu0 0.0
  %264 = vmatprep.subr.mxu0 0.0
  %265 = vmatpush1.msra.mxu0 0.0
  %266 = vmatprep.subr.mxu0 0.0
  %267 = vmatpush1.msra.mxu0 0.0
  %268 = vmatprep.subr.mxu0 0.0
  %269 = vmatpush1.msra.mxu0 0.0
  %270 = vmatprep.subr.mxu0 0.0
  %271 = vmatpush1.msra.mxu0 0.0
  %272 = vmatprep.subr.mxu0 0.0
  %273 = vmatpush1.msra.mxu0 0.0
  %274 = vmatprep.subr.mxu0 0.0
  %275 = vmatpush1.msra.mxu0 0.0
  %276 = vmatprep.subr.mxu0 0.0
  %277 = vmatpush1.msra.mxu0 0.0
  %278 = vmatprep.subr.mxu0 0.0
  %279 = vmatpush1.msra.mxu0 0.0
  %280 = vmatprep.subr.mxu0 0.0
  %281 = vmatpush1.msra.mxu0 0.0
  %282 = vmatprep.subr.mxu0 0.0
  %283 = vmatpush1.msra.mxu0 0.0
  %284 = vmatprep.subr.mxu0 0.0
  %285 = vmatpush1.msra.mxu0 0.0
  %286 = vmatprep.subr.mxu0 0.0
  %287 = vmatpush1.msra.mxu0 0.0
  %288 = vmatprep.subr.mxu0 0.0
  %289 = vmatpush1.msra.mxu0 0.0
  %290 = vmatprep.subr.mxu0 0.0
  %291 = vmatpush1.msra.mxu0 0.0
  %292 = vmatprep.subr.mxu0 0.0
  %293 = vmatpush1.msra.mxu0 0.0
  %294 = vmatprep.mubr.f32.mxu0 0.0
  %295 = vmatmul.mubr.f32.gmra.mrb[0].mxu0 %v228
  %v296 = vpop.f32.mrb[0].mxu0
  %v297 = vadd.f32 0.0, %v296
  %v298 = vpop.f32.mrb[0].mxu0
  %v299 = vadd.f32 0.0, %v298
  %300 = vdwg.mxu0
  %301 = vmatprep.subr.mxu0 %v213
  %302 = vmatpush1.msra.mxu0 %v212
  %303 = vmatprep.subr.mxu0 %v217
  %304 = vmatpush1.msra.mxu0 %v216
  %305 = vmatprep.subr.mxu0 %v221
  %306 = vmatpush1.msra.mxu0 %v220
  %307 = vmatprep.subr.mxu0 %v225
  %308 = vmatpush1.msra.mxu0 %v224
  %309 = vmatprep.subr.mxu0 0.0
  %310 = vmatpush1.msra.mxu0 0.0
  %311 = vmatprep.subr.mxu0 0.0
  %312 = vmatpush1.msra.mxu0 0.0
  %313 = vmatprep.subr.mxu0 0.0
  %314 = vmatpush1.msra.mxu0 0.0
  %315 = vmatprep.subr.mxu0 0.0
  %316 = vmatpush1.msra.mxu0 0.0
  %317 = vmatprep.subr.mxu0 0.0
  %318 = vmatpush1.msra.mxu0 0.0
  %319 = vmatprep.subr.mxu0 0.0
  %320 = vmatpush1.msra.mxu0 0.0
  %321 = vmatprep.subr.mxu0 0.0
  %322 = vmatpush1.msra.mxu0 0.0
  %323 = vmatprep.subr.mxu0 0.0
  %324 = vmatpush1.msra.mxu0 0.0
  %325 = vmatprep.subr.mxu0 0.0
  %326 = vmatpush1.msra.mxu0 0.0
  %327 = vmatprep.subr.mxu0 0.0
  %328 = vmatpush1.msra.mxu0 0.0
  %329 = vmatprep.subr.mxu0 0.0
  %330 = vmatpush1.msra.mxu0 0.0
  %331 = vmatprep.subr.mxu0 0.0
  %332 = vmatpush1.msra.mxu0 0.0
  %333 = vmatprep.subr.mxu0 0.0
  %334 = vmatpush1.msra.mxu0 0.0
  %335 = vmatprep.subr.mxu0 0.0
  %336 = vmatpush1.msra.mxu0 0.0
  %337 = vmatprep.subr.mxu0 0.0
  %338 = vmatpush1.msra.mxu0 0.0
  %339 = vmatprep.subr.mxu0 0.0
  %340 = vmatpush1.msra.mxu0 0.0
  %341 = vmatprep.subr.mxu0 0.0
  %342 = vmatpush1.msra.mxu0 0.0
  %343 = vmatprep.subr.mxu0 0.0
  %344 = vmatpush1.msra.mxu0 0.0
  %345 = vmatprep.subr.mxu0 0.0
  %346 = vmatpush1.msra.mxu0 0.0
  %347 = vmatprep.subr.mxu0 0.0
  %348 = vmatpush1.msra.mxu0 0.0
  %349 = vmatprep.subr.mxu0 0.0
  %350 = vmatpush1.msra.mxu0 0.0
  %351 = vmatprep.subr.mxu0 0.0
  %352 = vmatpush1.msra.mxu0 0.0
  %353 = vmatprep.subr.mxu0 0.0
  %354 = vmatpush1.msra.mxu0 0.0
  %355 = vmatprep.subr.mxu0 0.0
  %356 = vmatpush1.msra.mxu0 0.0
  %357 = vmatprep.subr.mxu0 0.0
  %358 = vmatpush1.msra.mxu0 0.0
  %359 = vmatprep.subr.mxu0 0.0
  %360 = vmatpush1.msra.mxu0 0.0
  %361 = vmatprep.subr.mxu0 0.0
  %362 = vmatpush1.msra.mxu0 0.0
  %363 = vmatprep.subr.mxu0 0.0
  %364 = vmatpush1.msra.mxu0 0.0
  %365 = vmatprep.mubr.f32.mxu0 0.0
  %366 = vmatmul.mubr.f32.gmra.mrb[0].mxu0 %v228
  %v367 = vpop.f32.mrb[0].mxu0
  %v368 = vadd.f32 0.0, %v367
  %v369 = vpop.f32.mrb[0].mxu0
  %v370 = vadd.f32 0.0, %v369
  %371 = vdwg.mxu0
  %373 = vset.pattern.permute.xlu0 3
  %374 = vperm.xlu0 %373, %v18
  %v375 = vpop.permute.xlu0 %374
  %v377 = vadd.f32 %v297, %v375
  %v378 = vadd.f32 %v299, %v375
  %v379 = vadd.f32 %v368, %v375
  %v380 = vadd.f32 %v370, %v375
  %v381 = vxor.u32 %v377, 2147483648
  %v382 = vxor.u32 %v378, 2147483648
  %v383 = vxor.u32 %v379, 2147483648
  %v384 = vxor.u32 %v380, 2147483648
  %v385 = vmul.f32 %v381, 1.442695
  %v386 = vpow.pop %v385
  %v387 = vmul.f32 %v382, 1.442695
  %v388 = vpow.pop %v387
  %v389 = vmul.f32 %v383, 1.442695
  %v390 = vpow.pop %v389
  %v391 = vmul.f32 %v384, 1.442695
  %v392 = vpow.pop %v391
  %v393 = vadd.f32 %v386, 1.0
  %v394 = vadd.f32 %v388, 1.0
  %v395 = vadd.f32 %v390, 1.0
  %v396 = vadd.f32 %v392, 1.0
  %v397 = vrcp.pop %v393
  %v398 = vmul.f32 1.0, %v397
  %v399 = vrcp.pop %v394
  %v400 = vmul.f32 1.0, %v399
  %v401 = vrcp.pop %v395
  %v402 = vmul.f32 1.0, %v401
  %v403 = vrcp.pop %v396
  %v404 = vmul.f32 1.0, %v403
  %v409 = vcombine.low %v398, %v400
  %v410 = vcombine.low %v402, %v404
  %413 = vst [vmem:[%s3] sm:$0x77] %v409
  %414 = vst [vmem:[%s3 + $0x8] sm:$0x77] %v410
  // Predicated region
  $region14: #{_network_forward_impl.1} parent=0 // pred_check
    _
  $region15: #{_network_forward_impl.1} parent=0 // pred_check_branch
    %416 = sbr.rel (0) target = $region17
  $region16: #{_network_forward_impl.1} parent=0 // pred_region
    _
  $region17: #{_network_forward_impl.1} parent=0 // pred_fallthru
    _
  // Predicated region
  $region18: #{_network_forward_impl.1} parent=0 // pred_check
    _
  $region19: #{_network_forward_impl.1} parent=0 // pred_check_branch
    %418 = sbr.rel (0) target = $region21
  $region20: #{_network_forward_impl.1} parent=0 // pred_region
    _
  $region21: #{_network_forward_impl.1} parent=0 // pred_fallthru
    _

</llo_original>
